<compile_context>
chip_gen: v7x
topology: tpu7x:2x2x1
jax: 0.10.0
libtpu: 0.0.40
codegen_flags: <defaults>
</compile_context>

<pallas_src>
import functools

import jax
import jax.numpy as jnp
from jax.experimental import pallas as pl
from jax.experimental.pallas import tpu as pltpu


def _round_up(x, m):
    return ((x + m - 1) // m) * m


# ---------------------------------------------------------------------------
# Kernel
# ---------------------------------------------------------------------------
def mlb_kernel(x_ref, wf_ref, wp_ref, bp_ref, out_ref):
    """x_ref:  (TILE_B, Din_pad)  fused [eeg | nirs | 1 | 0-pad] input
    wf_ref: (Din_pad, 2*E_pad)   block-diag fused embedding weight (+ biases)
    wp_ref: (E_pad, O_pad)       padded projection weight
    bp_ref: (1, O_pad)           padded projection bias
    out_ref:(TILE_B, O_pad)
    """
    e_pad = wf_ref.shape[1] // 2

    # Single MXU pass computes both embeddings (biases folded in via ones column).
    emb = jnp.dot(x_ref[...], wf_ref[...], preferred_element_type=jnp.float32)

    # Split along lanes at a 128-aligned boundary (cheap, layout-friendly).
    e = jnp.tanh(emb[:, :e_pad])
    n = jnp.tanh(emb[:, e_pad:])
    joint = e * n  # padded columns are tanh(0)*tanh(0)=0 -> harmless

    out = jnp.dot(joint, wp_ref[...], preferred_element_type=jnp.float32)
    out = out + bp_ref[...]
    out_ref[...] = out.astype(out_ref.dtype)


# ---------------------------------------------------------------------------
# Parameter packing (done once, outside the kernel)
# ---------------------------------------------------------------------------
def pack_params(params, eeg_dim, nirs_dim, emb_dim, out_dim):
    """Pack logical (in_features, out_features) weights into lane-dense,
    bias-folded blocks expected by the kernel."""
    f32 = jnp.float32
    d_raw = eeg_dim + nirs_dim + 1               # +1 -> ones column for biases
    din_pad = _round_up(d_raw, 128)
    e_pad = _round_up(emb_dim, 128)
    o_pad = _round_up(out_dim, 128)

    # Block-diagonal fused embedding weight, biases folded into the ones-row.
    wf = jnp.zeros((din_pad, 2 * e_pad), f32)
    wf = wf.at[:eeg_dim, :emb_dim].set(params["w_eeg"].astype(f32))
    wf = wf.at[eeg_dim:eeg_dim + nirs_dim, e_pad:e_pad + emb_dim].set(
        params["w_nirs"].astype(f32))
    wf = wf.at[eeg_dim + nirs_dim, :emb_dim].set(
        params["b_eeg"].reshape(-1).astype(f32))
    wf = wf.at[eeg_dim + nirs_dim, e_pad:e_pad + emb_dim].set(
        params["b_nirs"].reshape(-1).astype(f32))

    wp = jnp.zeros((e_pad, o_pad), f32)
    wp = wp.at[:emb_dim, :out_dim].set(params["w_proj"].astype(f32))

    bp = jnp.zeros((1, o_pad), f32)
    bp = bp.at[:, :out_dim].set(params["b_proj"].reshape(1, -1).astype(f32))

    dims = dict(eeg_dim=eeg_dim, nirs_dim=nirs_dim, emb_dim=emb_dim,
                out_dim=out_dim, din_pad=din_pad, e_pad=e_pad, o_pad=o_pad)
    return {"w_fused": wf, "w_proj": wp, "b_proj": bp, "dims": dims}


# ---------------------------------------------------------------------------
# Wrapper
# ---------------------------------------------------------------------------
def mlb_forward(eeg, nirs, packed):
    dims = packed["dims"]
    eeg_dim, nirs_dim = dims["eeg_dim"], dims["nirs_dim"]
    emb_dim, out_dim = dims["emb_dim"], dims["out_dim"]
    din_pad, e_pad, o_pad = dims["din_pad"], dims["e_pad"], dims["o_pad"]

    B = eeg.shape[0]

    # Batch tiling: amortize grid-step overhead; cap so double-buffered
    # activations fit comfortably in v7x's 32 MiB scoped VMEM.
    tile_b = min(512, _round_up(B, 8))
    b_pad = _round_up(B, tile_b)
    grid = (b_pad // tile_b,)

    # Fused, padded input: [eeg | nirs | 1 | zeros], (b_pad, din_pad).
    x = jnp.zeros((b_pad, din_pad), jnp.float32)
    x = x.at[:B, :eeg_dim].set(eeg.astype(jnp.float32))
    x = x.at[:B, eeg_dim:eeg_dim + nirs_dim].set(nirs.astype(jnp.float32))
    x = x.at[:, eeg_dim + nirs_dim].set(1.0)     # bias column

    wf, wp, bp = packed["w_fused"], packed["w_proj"], packed["b_proj"]

    flops = 2 * B * (eeg_dim * emb_dim + nirs_dim * emb_dim + emb_dim * out_dim)
    bytes_accessed = 4 * (x.size + wf.size + wp.size + bp.size + b_pad * o_pad)
    cost = pl.CostEstimate(flops=flops,
                           transcendentals=2 * B * emb_dim,
                           bytes_accessed=bytes_accessed)

    out_pad = pl.pallas_call(
        mlb_kernel,
        out_shape=jax.ShapeDtypeStruct((b_pad, o_pad), jnp.float32),
        grid=grid,
        in_specs=[
            pl.BlockSpec((tile_b, din_pad), lambda i: (i, 0)),   # activations: tiled
            pl.BlockSpec((din_pad, 2 * e_pad), lambda i: (0, 0)),  # weights: resident
            pl.BlockSpec((e_pad, o_pad), lambda i: (0, 0)),
            pl.BlockSpec((1, o_pad), lambda i: (0, 0)),
        ],
        out_specs=pl.BlockSpec((tile_b, o_pad), lambda i: (i, 0)),
        compiler_params=pltpu.CompilerParams(
            dimension_semantics=("parallel",),    # shard batch across TCs on v7x
            vmem_limit_bytes=32 * 1024 * 1024,
        ),
        cost_estimate=cost,
    )(x, wf, wp, bp)

    return out_pad[:B, :out_dim]


# ---------------------------------------------------------------------------
# Reference & init
# ---------------------------------------------------------------------------
def init_params(key, eeg_dim, nirs_dim, emb_dim, out_dim):
    ks = jax.random.split(key, 6)
    return {
        "w_eeg": jax.random.normal(ks[0], (eeg_dim, emb_dim), jnp.float32) * 0.1,
        "b_eeg": jax.random.normal(ks[1], (1, emb_dim), jnp.float32) * 0.1,
        "w_nirs": jax.random.normal(ks[2], (nirs_dim, emb_dim), jnp.float32) * 0.1,
        "b_nirs": jax.random.normal(ks[3], (1, emb_dim), jnp.float32) * 0.1,
        "w_proj": jax.random.normal(ks[4], (emb_dim, out_dim), jnp.float32) * 0.1,
        "b_proj": jax.random.normal(ks[5], (1, out_dim), jnp.float32) * 0.1,
    }


def mlb_reference(eeg, nirs, p):
    e = jnp.tanh(eeg @ p["w_eeg"] + p["b_eeg"])
    n = jnp.tanh(nirs @ p["w_nirs"] + p["b_nirs"])
    return (e * n) @ p["w_proj"] + p["b_proj"]


if __name__ == "__main__":
    key = jax.random.PRNGKey(0)
    k_eeg, k_nirs, k_par = jax.random.split(key, 3)

    B, EEG_DIM, NIRS_DIM, EMB_DIM, OUT_DIM = 8, 32, 16, 64, 8

    eeg = jax.random.normal(k_eeg, (B, EEG_DIM), jnp.float32)
    nirs = jax.random.normal(k_nirs, (B, NIRS_DIM), jnp.float32)
    params = init_params(k_par, EEG_DIM, NIRS_DIM, EMB_DIM, OUT_DIM)

    packed = pack_params(params, EEG_DIM, NIRS_DIM, EMB_DIM, OUT_DIM)

    out = mlb_forward(eeg, nirs, packed)
    out = jax.block_until_ready(out)

    ref = mlb_reference(eeg, nirs, params)
    assert out.shape == (B, OUT_DIM)
    assert jnp.allclose(out, ref, atol=1e-4, rtol=1e-4), "mismatch vs reference"

    print("KERNEL_OK")
</pallas_src>

<mosaic_0001>
module attributes {stable_mosaic.version = 11 : i64} {
  func.func @mlb_kernel(%arg0: i32, %arg1: memref<8x128xf32, #tpu.memory_space<vmem>>, %arg2: memref<128x256xf32, #tpu.memory_space<vmem>>, %arg3: memref<128x128xf32, #tpu.memory_space<vmem>>, %arg4: memref<1x128xf32, #tpu.memory_space<vmem>>, %arg5: memref<8x128xf32, #tpu.memory_space<vmem>>) attributes {dimension_semantics = [#tpu.dimension_semantics<parallel>], iteration_bounds = array<i64: 1>, scalar_prefetch = 0 : i64, scratch_operands = 0 : i64, tpu.core_type = #tpu.core_type<tc>, window_params = [{transform_indices = @transform_0, window_bounds = array<i64: 8, 128>}, {pipeline_mode = #tpu.pipeline_mode<synchronous>, transform_indices = @transform_1, window_bounds = array<i64: 128, 256>}, {pipeline_mode = #tpu.pipeline_mode<synchronous>, transform_indices = @transform_2, window_bounds = array<i64: 128, 128>}, {pipeline_mode = #tpu.pipeline_mode<synchronous>, transform_indices = @transform_3, window_bounds = array<i64: 1, 128>}, {transform_indices = @transform_4, window_bounds = array<i64: 8, 128>}]} {
    %c0 = arith.constant 0 : index
    %c0_0 = arith.constant 0 : index
    %0 = vector.load %arg1[%c0, %c0_0] : memref<8x128xf32, #tpu.memory_space<vmem>>, vector<8x128xf32>
    %c0_1 = arith.constant 0 : index
    %c0_2 = arith.constant 0 : index
    %1 = vector.load %arg2[%c0_1, %c0_2] : memref<128x256xf32, #tpu.memory_space<vmem>>, vector<128x256xf32>
    %cst = arith.constant dense<0.000000e+00> : vector<8x256xf32>
    %2 = tpu.matmul %0, %1, %cst {dimension_numbers = #tpu.dot_dimension_numbers<[1], [0], [0], [1], [0, 0, 1, 1], [], []>} : vector<8x128xf32>, vector<128x256xf32>, vector<8x256xf32> -> vector<8x256xf32>
    %3 = vector.extract_strided_slice %2 {offsets = [0, 0], sizes = [8, 128], strides = [1, 1]} : vector<8x256xf32> to vector<8x128xf32>
    %4 = math.tanh %3 : vector<8x128xf32>
    %5 = vector.extract_strided_slice %2 {offsets = [0, 128], sizes = [8, 128], strides = [1, 1]} : vector<8x256xf32> to vector<8x128xf32>
    %6 = math.tanh %5 : vector<8x128xf32>
    %7 = arith.mulf %4, %6 : vector<8x128xf32>
    %c0_3 = arith.constant 0 : index
    %c0_4 = arith.constant 0 : index
    %8 = vector.load %arg3[%c0_3, %c0_4] : memref<128x128xf32, #tpu.memory_space<vmem>>, vector<128x128xf32>
    %cst_5 = arith.constant dense<0.000000e+00> : vector<8x128xf32>
    %9 = tpu.matmul %7, %8, %cst_5 {dimension_numbers = #tpu.dot_dimension_numbers<[1], [0], [0], [1], [0, 0, 1, 1], [], []>} : vector<8x128xf32>, vector<128x128xf32>, vector<8x128xf32> -> vector<8x128xf32>
    %c0_6 = arith.constant 0 : index
    %c0_7 = arith.constant 0 : index
    %10 = vector.load %arg4[%c0_6, %c0_7] : memref<1x128xf32, #tpu.memory_space<vmem>>, vector<1x128xf32>
    %11 = vector.broadcast %10 : vector<1x128xf32> to vector<8x128xf32>
    %12 = arith.addf %9, %11 : vector<8x128xf32>
    %c0_8 = arith.constant 0 : index
    %c0_9 = arith.constant 0 : index
    %13 = vector.load %arg5[%c0_8, %c0_9] : memref<8x128xf32, #tpu.memory_space<vmem>>, vector<8x128xf32>
    tpu.vector_store %arg5[%c0_8, %c0_9], %12 {strides = array<i32>} : memref<8x128xf32, #tpu.memory_space<vmem>>, vector<8x128xf32>,
    return
  }
  func.func @transform_0(%arg0: i32) -> (i32, i32) {
    %c0_i32 = arith.constant 0 : i32
    %c0_i32_0 = arith.constant 0 : i32
    return %arg0, %c0_i32 : i32, i32
  }
  func.func @transform_1(%arg0: i32) -> (i32, i32) {
    %c0_i32 = arith.constant 0 : i32
    %c0_i32_0 = arith.constant 0 : i32
    %c0_i32_1 = arith.constant 0 : i32
    return %c0_i32, %c0_i32_0 : i32, i32
  }
  func.func @transform_2(%arg0: i32) -> (i32, i32) {
    %c0_i32 = arith.constant 0 : i32
    %c0_i32_0 = arith.constant 0 : i32
    %c0_i32_1 = arith.constant 0 : i32
    return %c0_i32, %c0_i32_0 : i32, i32
  }
  func.func @transform_3(%arg0: i32) -> (i32, i32) {
    %c0_i32 = arith.constant 0 : i32
    %c0_i32_0 = arith.constant 0 : i32
    %c0_i32_1 = arith.constant 0 : i32
    return %c0_i32, %c0_i32_0 : i32, i32
  }
  func.func @transform_4(%arg0: i32) -> (i32, i32) {
    %c0_i32 = arith.constant 0 : i32
    %c0_i32_0 = arith.constant 0 : i32
    return %arg0, %c0_i32 : i32, i32
  }
}

</mosaic_0001>

<llo_original>
// kernel: tpu_custom_call.1
$region0: #{tpu_custom_call.1}
  #allocation0 [shape = 'u32[]', space=smem, size = 0x4, offset = 0x4, fixed_abs, tag = 'smem constant byte address 0x4 - core index']
  #allocation1 [shape = 'u32[144,128]{1,0:T(1,128)}', space=vmem, size = 0x12000, scoped, tag = 'internal scratch']
  %s0 = inlined_call_operand.hbm [shape: f32[8,128], index: 0, kind: input, shape index: {}]
  %s1 = inlined_call_operand.hbm [shape: f32[128,256], index: 1, kind: input, shape index: {}]
  %s2 = inlined_call_operand.hbm [shape: f32[128,128], index: 2, kind: input, shape index: {}]
  %s3 = inlined_call_operand.vmem [shape: f32[1,128], index: 3, kind: input, shape index: {}]
  %s4 = inlined_call_operand.hbm [shape: f32[8,128], index: 4, kind: output, shape index: {}]
  %s5 = sld [smem:[#allocation0]]
  $region38: #{tpu_custom_call.1} parent=0
    _
  %s7 = ssub.s32 1, %s5
  %s8 = scalar_select 0, %s7, %s5
  $region1: #{tpu_custom_call.1} parent=0
    #allocation2 [shape = 'u8[4096]{0}', space=vmem, size = 0x1000, scoped, tag = 'input window, operand 0, single buffered']
    #allocation3 [shape = 's32[1]{0}', space=sflag, size = 0x4, scoped, tag = 'scoped memory for tpu_custom_call.1']
    #allocation4 [shape = 's32[1]{0}', space=sflag, size = 0x4, scoped, tag = 'scoped memory for tpu_custom_call.1']
    #allocation5 [shape = 'u8[131072]{0}', space=vmem, size = 0x20000, scoped, tag = 'input window, operand 1, single buffered']
    #allocation6 [shape = 's32[1]{0}', space=sflag, size = 0x4, scoped, tag = 'scoped memory for tpu_custom_call.1']
    #allocation7 [shape = 'u8[65536]{0}', space=vmem, size = 0x10000, scoped, tag = 'input window, operand 2, single buffered']
    #allocation8 [shape = 'u8[4096]{0}', space=vmem, size = 0x1000, scoped, tag = 'output window, operand 0, single buffered']
    %9 = vsyncpa [#allocation3], 0
    %10 = vsyncpa [#allocation6], 0
    %11 = vsyncpa [#allocation4], 0
    // Predicated region
    $region2: #{tpu_custom_call.1} parent=1 // pred_check
      _
    $region3: #{tpu_custom_call.1} parent=1 // pred_check_branch
      %13 = sbr.rel (0) target = $region5
    $region4: #{tpu_custom_call.1} parent=1 // pred_region
      %s15 = ssub.s32 128, 128
      %16 = vsyncadd [#allocation3], %s15
      %s18 = sshll.u32 [#allocation2], 4
      %s19 = int_to_ptr.vmem [resolvable:$true] %s18
      %21 = dma.hbm_to_vmem [thread:$0]  %s0, 128, %s19, [#allocation3]
    $region5: #{tpu_custom_call.1} parent=1 // pred_fallthru
      _
    // Predicated region
    $region6: #{tpu_custom_call.1} parent=1 // pred_check
      _
    $region7: #{tpu_custom_call.1} parent=1 // pred_check_branch
      %23 = sbr.rel (0) target = $region9
    $region8: #{tpu_custom_call.1} parent=1 // pred_region
      %s25 = ssub.s32 4096, 4096
      %26 = vsyncadd [#allocation6], %s25
      %s27 = sshll.u32 [#allocation5], 4
      %s28 = int_to_ptr.vmem [resolvable:$true] %s27
      %33 = dma.hbm_to_vmem [thread:$0]  %s1, 4096, %s28, [#allocation6], 256, 256, 16
    $region9: #{tpu_custom_call.1} parent=1 // pred_fallthru
      _
    // Predicated region
    $region10: #{tpu_custom_call.1} parent=1 // pred_check
      _
    $region11: #{tpu_custom_call.1} parent=1 // pred_check_branch
      %35 = sbr.rel (0) target = $region13
    $region12: #{tpu_custom_call.1} parent=1 // pred_region
      %s37 = ssub.s32 2048, 2048
      %38 = vsyncadd [#allocation6], %s37
      %s39 = sshll.u32 [#allocation7], 4
      %s40 = int_to_ptr.vmem [resolvable:$true] %s39
      %45 = dma.hbm_to_vmem [thread:$0]  %s2, 2048, %s40, [#allocation6], 128, 128, 8
    $region13: #{tpu_custom_call.1} parent=1 // pred_fallthru
      _
    // Predicated region
    $region14: #{tpu_custom_call.1} parent=1 // pred_check
      _
    $region15: #{tpu_custom_call.1} parent=1 // pred_check_branch
      %47 = sbr.rel (0) target = $region17
    $region16: #{tpu_custom_call.1} parent=1 // pred_region
      _
    $region17: #{tpu_custom_call.1} parent=1 // pred_fallthru
      _
    // Predicated region
    $region18: #{tpu_custom_call.1} parent=1 // pred_check
      _
    $region19: #{tpu_custom_call.1} parent=1 // pred_check_branch
      %49 = sbr.rel (0) target = $region21
    $region20: #{tpu_custom_call.1} parent=1 // pred_region
      %50 = dma.done [#allocation3], 128
    $region21: #{tpu_custom_call.1} parent=1 // pred_fallthru
      _
    // Predicated region
    $region22: #{tpu_custom_call.1} parent=1 // pred_check
      _
    $region23: #{tpu_custom_call.1} parent=1 // pred_check_branch
      %52 = sbr.rel (0) target = $region25
    $region24: #{tpu_custom_call.1} parent=1 // pred_region
      %53 = dma.done [#allocation6], 4096
    $region25: #{tpu_custom_call.1} parent=1 // pred_fallthru
      _
    // Predicated region
    $region26: #{tpu_custom_call.1} parent=1 // pred_check
      _
    $region27: #{tpu_custom_call.1} parent=1 // pred_check_branch
      %55 = sbr.rel (0) target = $region29
    $region28: #{tpu_custom_call.1} parent=1 // pred_region
      %56 = dma.done [#allocation6], 2048
    $region29: #{tpu_custom_call.1} parent=1 // pred_fallthru
      _
    %v57 = vld [vmem:[#allocation2] sm:$0xff]
    %v58 = vld [vmem:[#allocation5] sm:$0xff]
    %v59 = vld [vmem:[#allocation5 + $0x8] sm:$0xff]
    %v60 = vld [vmem:[#allocation5 + $0x10] sm:$0xff]
    %v61 = vld [vmem:[#allocation5 + $0x18] sm:$0xff]
    %v62 = vld [vmem:[#allocation5 + $0x20] sm:$0xff]
    %v63 = vld [vmem:[#allocation5 + $0x28] sm:$0xff]
    %v64 = vld [vmem:[#allocation5 + $0x30] sm:$0xff]
    %v65 = vld [vmem:[#allocation5 + $0x38] sm:$0xff]
    %v66 = vld [vmem:[#allocation5 + $0x40] sm:$0xff]
    %v67 = vld [vmem:[#allocation5 + $0x48] sm:$0xff]
    %v68 = vld [vmem:[#allocation5 + $0x50] sm:$0xff]
    %v69 = vld [vmem:[#allocation5 + $0x58] sm:$0xff]
    %v70 = vld [vmem:[#allocation5 + $0x60] sm:$0xff]
    %v71 = vld [vmem:[#allocation5 + $0x68] sm:$0xff]
    %v72 = vld [vmem:[#allocation5 + $0x70] sm:$0xff]
    %v73 = vld [vmem:[#allocation5 + $0x78] sm:$0xff]
    %v74 = vld [vmem:[#allocation5 + $0x80] sm:$0xff]
    %v75 = vld [vmem:[#allocation5 + $0x88] sm:$0xff]
    %v76 = vld [vmem:[#allocation5 + $0x90] sm:$0xff]
    %v77 = vld [vmem:[#allocation5 + $0x98] sm:$0xff]
    %v78 = vld [vmem:[#allocation5 + $0xa0] sm:$0xff]
    %v79 = vld [vmem:[#allocation5 + $0xa8] sm:$0xff]
    %v80 = vld [vmem:[#allocation5 + $0xb0] sm:$0xff]
    %v81 = vld [vmem:[#allocation5 + $0xb8] sm:$0xff]
    %v82 = vld [vmem:[#allocation5 + $0xc0] sm:$0xff]
    %v83 = vld [vmem:[#allocation5 + $0xc8] sm:$0xff]
    %v84 = vld [vmem:[#allocation5 + $0xd0] sm:$0xff]
    %v85 = vld [vmem:[#allocation5 + $0xd8] sm:$0xff]
    %v86 = vld [vmem:[#allocation5 + $0xe0] sm:$0xff]
    %v87 = vld [vmem:[#allocation5 + $0xe8] sm:$0xff]
    %v88 = vld [vmem:[#allocation5 + $0xf0] sm:$0xff]
    %v89 = vld [vmem:[#allocation5 + $0xf8] sm:$0xff]
    %90 = vmatprep.subr.mxu0 %v59
    %91 = vmatpush1.msra.mxu0 %v58
    %92 = vmatprep.subr.mxu0 %v61
    %93 = vmatpush1.msra.mxu0 %v60
    %94 = vmatprep.subr.mxu0 %v63
    %95 = vmatpush1.msra.mxu0 %v62
    %96 = vmatprep.subr.mxu0 %v65
    %97 = vmatpush1.msra.mxu0 %v64
    %98 = vmatprep.subr.mxu0 %v67
    %99 = vmatpush1.msra.mxu0 %v66
    %100 = vmatprep.subr.mxu0 %v69
    %101 = vmatpush1.msra.mxu0 %v68
    %102 = vmatprep.subr.mxu0 %v71
    %103 = vmatpush1.msra.mxu0 %v70
    %104 = vmatprep.subr.mxu0 %v73
    %105 = vmatpush1.msra.mxu0 %v72
    %106 = vmatprep.subr.mxu0 %v75
    %107 = vmatpush1.msra.mxu0 %v74
    %108 = vmatprep.subr.mxu0 %v77
    %109 = vmatpush1.msra.mxu0 %v76
    %110 = vmatprep.subr.mxu0 %v79
    %111 = vmatpush1.msra.mxu0 %v78
    %112 = vmatprep.subr.mxu0 %v81
    %113 = vmatpush1.msra.mxu0 %v80
    %114 = vmatprep.subr.mxu0 %v83
    %115 = vmatpush1.msra.mxu0 %v82
    %116 = vmatprep.subr.mxu0 %v85
    %117 = vmatpush1.msra.mxu0 %v84
    %118 = vmatprep.subr.mxu0 %v87
    %119 = vmatpush1.msra.mxu0 %v86
    %120 = vmatprep.subr.mxu0 %v89
    %121 = vmatpush1.msra.mxu0 %v88
    %122 = vmatprep.subr.mxu0 0.0
    %123 = vmatpush1.msra.mxu0 0.0
    %124 = vmatprep.subr.mxu0 0.0
    %125 = vmatpush1.msra.mxu0 0.0
    %126 = vmatprep.subr.mxu0 0.0
    %127 = vmatpush1.msra.mxu0 0.0
    %128 = vmatprep.subr.mxu0 0.0
    %129 = vmatpush1.msra.mxu0 0.0
    %130 = vmatprep.subr.mxu0 0.0
    %131 = vmatpush1.msra.mxu0 0.0
    %132 = vmatprep.subr.mxu0 0.0
    %133 = vmatpush1.msra.mxu0 0.0
    %134 = vmatprep.subr.mxu0 0.0
    %135 = vmatpush1.msra.mxu0 0.0
    %136 = vmatprep.subr.mxu0 0.0
    %137 = vmatpush1.msra.mxu0 0.0
    %138 = vmatprep.subr.mxu0 0.0
    %139 = vmatpush1.msra.mxu0 0.0
    %140 = vmatprep.subr.mxu0 0.0
    %141 = vmatpush1.msra.mxu0 0.0
    %142 = vmatprep.subr.mxu0 0.0
    %143 = vmatpush1.msra.mxu0 0.0
    %144 = vmatprep.subr.mxu0 0.0
    %145 = vmatpush1.msra.mxu0 0.0
    %146 = vmatprep.subr.mxu0 0.0
    %147 = vmatpush1.msra.mxu0 0.0
    %148 = vmatprep.subr.mxu0 0.0
    %149 = vmatpush1.msra.mxu0 0.0
    %150 = vmatprep.subr.mxu0 0.0
    %151 = vmatpush1.msra.mxu0 0.0
    %152 = vmatprep.subr.mxu0 0.0
    %153 = vmatpush1.msra.mxu0 0.0
    %154 = vmatprep.mubr.f32.mxu0 0.0
    %155 = vmatmul.mubr.f32.gmra.mrb[0].mxu0 %v57
    %v156 = vpop.f32.mrb[0].mxu0
    %v157 = vadd.f32 0.0, %v156
    %v158 = vpop.f32.mrb[0].mxu0
    %v159 = vadd.f32 0.0, %v158
    %160 = vdwg.mxu0
    %v161 = vtanh.pop %v157
    %v162 = vtanh.pop %v159
    %v163 = vmul.f32 %v161, %v162
    %v164 = vld [vmem:[#allocation7] sm:$0xff]
    %v165 = vld [vmem:[#allocation7 + $0x8] sm:$0xff]
    %v166 = vld [vmem:[#allocation7 + $0x10] sm:$0xff]
    %v167 = vld [vmem:[#allocation7 + $0x18] sm:$0xff]
    %v168 = vld [vmem:[#allocation7 + $0x20] sm:$0xff]
    %v169 = vld [vmem:[#allocation7 + $0x28] sm:$0xff]
    %v170 = vld [vmem:[#allocation7 + $0x30] sm:$0xff]
    %v171 = vld [vmem:[#allocation7 + $0x38] sm:$0xff]
    %v172 = vld [vmem:[#allocation7 + $0x40] sm:$0xff]
    %v173 = vld [vmem:[#allocation7 + $0x48] sm:$0xff]
    %v174 = vld [vmem:[#allocation7 + $0x50] sm:$0xff]
    %v175 = vld [vmem:[#allocation7 + $0x58] sm:$0xff]
    %v176 = vld [vmem:[#allocation7 + $0x60] sm:$0xff]
    %v177 = vld [vmem:[#allocation7 + $0x68] sm:$0xff]
    %v178 = vld [vmem:[#allocation7 + $0x70] sm:$0xff]
    %v179 = vld [vmem:[#allocation7 + $0x78] sm:$0xff]
    %v180 = vld [vmem:[%s3] sm:$0x1]
    %v182 = vlaneseq
    %v183 = vshrl.u32 %v182, 7
    %v184 = vsub.s32 0, %v183
    %v185 = vrot.slane %v180, %v184
    %187 = vmatprep.subr.mxu0 0.0
    %188 = vmatpush1.msra.mxu0 %v164
    %189 = vmatprep.subr.mxu0 0.0
    %190 = vmatpush1.msra.mxu0 %v165
    %191 = vmatprep.subr.mxu0 0.0
    %192 = vmatpush1.msra.mxu0 %v166
    %193 = vmatprep.subr.mxu0 0.0
    %194 = vmatpush1.msra.mxu0 %v167
    %195 = vmatprep.subr.mxu0 0.0
    %196 = vmatpush1.msra.mxu0 %v168
    %197 = vmatprep.subr.mxu0 0.0
    %198 = vmatpush1.msra.mxu0 %v169
    %199 = vmatprep.subr.mxu0 0.0
    %200 = vmatpush1.msra.mxu0 %v170
    %201 = vmatprep.subr.mxu0 0.0
    %202 = vmatpush1.msra.mxu0 %v171
    %203 = vmatprep.subr.mxu0 0.0
    %204 = vmatpush1.msra.mxu0 %v172
    %205 = vmatprep.subr.mxu0 0.0
    %206 = vmatpush1.msra.mxu0 %v173
    %207 = vmatprep.subr.mxu0 0.0
    %208 = vmatpush1.msra.mxu0 %v174
    %209 = vmatprep.subr.mxu0 0.0
    %210 = vmatpush1.msra.mxu0 %v175
    %211 = vmatprep.subr.mxu0 0.0
    %212 = vmatpush1.msra.mxu0 %v176
    %213 = vmatprep.subr.mxu0 0.0
    %214 = vmatpush1.msra.mxu0 %v177
    %215 = vmatprep.subr.mxu0 0.0
    %216 = vmatpush1.msra.mxu0 %v178
    %217 = vmatprep.subr.mxu0 0.0
    %218 = vmatpush1.msra.mxu0 %v179
    %219 = vmatprep.subr.mxu0 0.0
    %220 = vmatpush1.msra.mxu0 0.0
    %221 = vmatprep.subr.mxu0 0.0
    %222 = vmatpush1.msra.mxu0 0.0
    %223 = vmatprep.subr.mxu0 0.0
    %224 = vmatpush1.msra.mxu0 0.0
    %225 = vmatprep.subr.mxu0 0.0
    %226 = vmatpush1.msra.mxu0 0.0
    %227 = vmatprep.subr.mxu0 0.0
    %228 = vmatpush1.msra.mxu0 0.0
    %229 = vmatprep.subr.mxu0 0.0
    %230 = vmatpush1.msra.mxu0 0.0
    %231 = vmatprep.subr.mxu0 0.0
    %232 = vmatpush1.msra.mxu0 0.0
    %233 = vmatprep.subr.mxu0 0.0
    %234 = vmatpush1.msra.mxu0 0.0
    %235 = vmatprep.subr.mxu0 0.0
    %236 = vmatpush1.msra.mxu0 0.0
    %237 = vmatprep.subr.mxu0 0.0
    %238 = vmatpush1.msra.mxu0 0.0
    %239 = vmatprep.subr.mxu0 0.0
    %240 = vmatpush1.msra.mxu0 0.0
    %241 = vmatprep.subr.mxu0 0.0
    %242 = vmatpush1.msra.mxu0 0.0
    %243 = vmatprep.subr.mxu0 0.0
    %244 = vmatpush1.msra.mxu0 0.0
    %245 = vmatprep.subr.mxu0 0.0
    %246 = vmatpush1.msra.mxu0 0.0
    %247 = vmatprep.subr.mxu0 0.0
    %248 = vmatpush1.msra.mxu0 0.0
    %249 = vmatprep.subr.mxu0 0.0
    %250 = vmatpush1.msra.mxu0 0.0
    %251 = vmatprep.mubr.f32.mxu0 0.0
    %252 = vmatmul.mubr.f32.gmra.mrb[0].mxu0 %v163
    %v253 = vpop.f32.mrb[0].mxu0
    %v254 = vadd.f32 %v185, %v253
    %v255 = vpop.f32.mrb[0].mxu0
    %256 = vdwg.mxu0
    %257 = vst [vmem:[#allocation8] sm:$0xff] %v254
    // Predicated region
    $region30: #{tpu_custom_call.1} parent=1 // pred_check
      _
    $region31: #{tpu_custom_call.1} parent=1 // pred_check_branch
      %259 = sbr.rel (0) target = $region33
    $region32: #{tpu_custom_call.1} parent=1 // pred_region
      %s261 = ssub.s32 128, 128
      %262 = vsyncadd [#allocation4], %s261
      %s264 = sshll.u32 [#allocation8], 4
      %s265 = int_to_ptr.vmem [resolvable:$true] %s264
      %267 = dma.vmem_to_hbm [thread:$0]  %s265, 128, %s4, [#allocation4]
    $region33: #{tpu_custom_call.1} parent=1 // pred_fallthru
      _
    // Predicated region
    $region34: #{tpu_custom_call.1} parent=1 // pred_check
      _
    $region35: #{tpu_custom_call.1} parent=1 // pred_check_branch
      %269 = sbr.rel (0) target = $region37
    $region36: #{tpu_custom_call.1} parent=1 // pred_region
      %270 = dma.done [#allocation4], 128
    $region37: #{tpu_custom_call.1} parent=1 // pred_fallthru
      _
    %271 = vsyncpa [#allocation3], 1
    %272 = vsyncpa [#allocation6], 1
    %273 = vsyncpa [#allocation4], 1

</llo_original>
